<compile_context>
chip_gen: v7x
topology: tpu7x:2x2x1
jax: 0.10.0
libtpu: 0.0.40
codegen_flags: <defaults>
</compile_context>

<pallas_src>
import functools
import math

import jax
import jax.numpy as jnp
from jax import lax
from jax.experimental import pallas as pl
from jax.experimental.pallas import tpu as pltpu

# constants copied from the PyTorch module
_B_INIT = math.log(math.e)   # raw B -> sigmoid(raw) in forward
_I_INIT = math.log(0.004)    # raw I -> exp(raw)     in forward
_K_INIT = math.log(1.0)      # raw K -> exp(raw)     in forward
_M_INIT = 0.05               # moment arms, column 0 negated

_MAX_TILE_B = 2048           # upper bound on batch lanes per grid step
_SINGLE_TILE_B = 256         # below this, one full-extent tile (overhead-bound)
_VMEM_BUDGET = 8 * 1024 * 1024   # conservative: inside v5e's 16 MiB scoped default


def _joints_kernel(dt, speed_mode, x_ref, p_ref, y_ref):
    # x_ref : (6, J, TB)  planes [F0, F1, Km0, Km1, th, dth]
    # p_ref : (6, J, 1)   planes [M0^2/I, M1^2/I, K_joint/I, -2B, M0/I, M1/I]
    # y_ref : (2, J, TB)  planes [ss0, ss1]
    f0 = x_ref[0]
    f1 = x_ref[1]
    km0 = x_ref[2]
    km1 = x_ref[3]
    th = x_ref[4]
    dth = x_ref[5]

    m0sq_oI = p_ref[0]        # (J, 1) -> lane-broadcasts over the batch tile
    m1sq_oI = p_ref[1]
    kj_oI = p_ref[2]
    neg2B = p_ref[3]
    m0_oI = p_ref[4]
    m1_oI = p_ref[5]

    # K/I = (sum_m K_musc[..., m] * M[m]^2 + K_joint) / I   (> 0, incl. padding)
    KoI = km0 * m0sq_oI + km1 * m1sq_oI + kj_oI
    A10 = -KoI
    A11 = neg2B * jnp.sqrt(KoI)          # -2*B*sqrt(K*I)/I == -2*B*sqrt(K/I)
    # forcing term: B = [0, b1], b1 = -sum_m F[..., m] * M[m] / I
    b1 = -(f0 * m0_oI + f1 * m1_oI)

    if speed_mode:
        # Euler step: SS' = (A @ SS + B) * dt + SS, A = [[0,1],[A10,A11]]
        ss0 = th + dth * dt
        ss1 = dth + (A10 * th + A11 * dth + b1) * dt
    else:
        # Exact integration: SS' = exp(A dt) SS + A^{-1} (exp(A dt) - I) B
        # 2x2 matrix exponential of A*dt = [[0, dt], [c, d]]
        c = A10 * dt
        d = A11 * dt
        s = 0.5 * d               # trace / 2
        q = -s                    # (a - d)/2 with a = 0
        delta = s * s + dt * c    # q^2 + b*c
        abs_delta = jnp.abs(delta)
        mu = jnp.sqrt(abs_delta)
        small = abs_delta < 1e-12           # mu < 1e-6
        inv_safe_mu = lax.rsqrt(jnp.where(small, 1.0, abs_delta))
        pos = delta >= 0.0
        # hyperbolic branch via a single exp; argument clamped to 0 on the
        # oscillatory branch so the unselected where-arm cannot overflow.
        mu_h = jnp.where(pos, mu, 0.0)
        e = jnp.exp(mu_h)
        inv_e = pl.reciprocal(e, approx=True)
        ch = jnp.where(pos, 0.5 * (e + inv_e), jnp.cos(mu))
        sh = jnp.where(pos, 0.5 * (e - inv_e), jnp.sin(mu))
        shc = jnp.where(small, 1.0 + delta * (1.0 / 6.0), sh * inv_safe_mu)
        es = jnp.exp(s)
        E00 = es * (ch + q * shc)
        E01 = es * (dt * shc)
        E10 = es * (c * shc)
        E11 = es * (ch - q * shc)

        # A^{-1} (E - I) @ [0, b1]^T  with det(A) = -A10 = K/I > 0
        inv_det = pl.reciprocal(KoI, approx=True)
        u0 = (A11 * E01 - (E11 - 1.0)) * inv_det * b1
        ss0 = E00 * th + E01 * dth + u0
        ss1 = E10 * th + E11 * dth + E01 * b1   # (-A10*inv_det)*E01*b1 == E01*b1

    y_ref[0, :, :] = ss0
    y_ref[1, :, :] = ss1


def _pick_tiling(batch, n_joints):
    """Return (tile_b, padded_b, n_tiles); tile from a VMEM budget, >=2 tiles
    once the batch is large enough so both v7x TensorCores get work."""
    if batch <= _SINGLE_TILE_B:
        return batch, batch, 1
    # double-buffered (6 in + 2 out) f32 planes per lane
    bytes_per_lane = (6 + 2) * n_joints * 4 * 2
    cap = max(128, (_VMEM_BUDGET // bytes_per_lane) // 128 * 128)
    max_tile = min(_MAX_TILE_B, cap)
    n_tiles = max(2, -(-batch // max_tile))          # >= 2 grid steps
    tile_b = -(-batch // n_tiles)
    tile_b = ((tile_b + 127) // 128) * 128           # lane-aligned
    padded_b = n_tiles * tile_b
    return tile_b, padded_b, n_tiles


@functools.partial(jax.jit, static_argnames=("dt", "speed_mode"))
def joints_forward(F, K_musc, SS, I_raw, B_raw, K_raw, M, *, dt,
                   speed_mode=False):
    """JAX/Pallas equivalent of Joints.forward.

    F, K_musc, SS : (batch, n_joints, 2) float32
    I_raw, B_raw, K_raw : (n_joints,) raw parameters (pre-parametrization)
    M : (n_joints, 2) moment arms
    Returns (SSout[:, :, 0], muscle_SSs, SSout) matching the PyTorch module.
    """
    F = F.astype(jnp.float32)
    K_musc = K_musc.astype(jnp.float32)
    SS = SS.astype(jnp.float32)
    M = M.astype(jnp.float32)
    batch, n_joints, _ = F.shape

    # parametrizations from torch forward: Exponential for I/K, Sigmoid for B.
    # Fold 1/I into every per-joint scalar once, outside the kernel.
    inv_I = jnp.exp(-I_raw.astype(jnp.float32))
    K_eff = jnp.exp(K_raw.astype(jnp.float32))
    B_eff = jax.nn.sigmoid(B_raw.astype(jnp.float32))
    M0 = M[:, 0]
    M1 = M[:, 1]
    params = jnp.stack(
        [M0 * M0 * inv_I, M1 * M1 * inv_I, K_eff * inv_I,
         -2.0 * B_eff, M0 * inv_I, M1 * inv_I], axis=0
    )[..., None]                                            # (6, J, 1)

    # one fused concat+transpose: (B, J, 6) -> (6, J, B) lane-dense slab
    X = jnp.transpose(jnp.concatenate([F, K_musc, SS], axis=-1), (2, 1, 0))

    tile_b, padded_b, n_tiles = _pick_tiling(batch, n_joints)
    if padded_b != batch:
        X = jnp.pad(X, ((0, 0), (0, 0), (0, padded_b - batch)))

    kernel = functools.partial(_joints_kernel, float(dt), bool(speed_mode))

    Y = pl.pallas_call(
        kernel,
        out_shape=jax.ShapeDtypeStruct((2, n_joints, padded_b), jnp.float32),
        grid=(n_tiles,),
        in_specs=[
            pl.BlockSpec((6, n_joints, tile_b), lambda i: (0, 0, i)),
            pl.BlockSpec((6, n_joints, 1), lambda i: (0, 0, 0)),
        ],
        out_specs=pl.BlockSpec((2, n_joints, tile_b), lambda i: (0, 0, i)),
        compiler_params=pltpu.CompilerParams(
            dimension_semantics=("parallel",)),
    )(X, params)

    Y = Y[:, :, :batch]                                     # (2, J, B)
    SSout = jnp.transpose(Y, (2, 1, 0))                     # (B, J, 2)
    # muscle_SSs[b, j, i, m] = SSout[b, j, i] * M[j, m]  (fused in the wrapper)
    muscle_SSs = SSout[..., None] * M[None, :, None, :]     # (B, J, 2, 2)
    return SSout[:, :, 0], muscle_SSs, SSout


@functools.partial(jax.jit, static_argnames=("dt", "speed_mode"))
def _joints_ref(F, K_musc, SS, I_raw, B_raw, K_raw, M, *, dt,
                speed_mode=False):
    """Pure-JAX reference mirroring the PyTorch forward (for the self-test)."""
    F = F.astype(jnp.float32)
    K_musc = K_musc.astype(jnp.float32)
    SS = SS.astype(jnp.float32)
    M = M.astype(jnp.float32)
    I_eff = jnp.exp(I_raw.astype(jnp.float32))[None, :]
    K_eff = jnp.exp(K_raw.astype(jnp.float32))[None, :]
    B_eff = jax.nn.sigmoid(B_raw.astype(jnp.float32))[None, :]

    K = (K_musc * M[None] ** 2).sum(-1) + K_eff
    A10 = -K / I_eff
    D = 2.0 * jnp.sqrt(K * I_eff)
    A11 = -D * B_eff / I_eff
    z = jnp.zeros_like(A10)
    o = jnp.ones_like(A10)
    A = jnp.stack([jnp.stack([z, o], -1), jnp.stack([A10, A11], -1)], -2)
    b1 = -(F * M[None]).sum(-1) / I_eff
    Bv = jnp.stack([z, b1], -1)[..., None]
    if speed_mode:
        SSout = (A @ SS[..., None] + Bv) * dt + SS[..., None]
    else:
        expAt = jax.vmap(jax.vmap(jax.scipy.linalg.expm))(A * dt)
        eye = jnp.eye(2, dtype=jnp.float32)
        SSout = expAt @ SS[..., None] + jnp.linalg.solve(A, expAt - eye) @ Bv
    SSout = SSout[..., 0]
    muscle_SSs = SSout[..., None] * M[None, :, None, :]
    return SSout[..., 0], muscle_SSs, SSout


if __name__ == "__main__":
    batch = 2
    n_joints = 8
    dt = 0.01

    key = jax.random.PRNGKey(0)
    k1, k2, k3 = jax.random.split(key, 3)
    F = jax.random.normal(k1, (batch, n_joints, 2), dtype=jnp.float32)
    K_musc = jax.random.uniform(k2, (batch, n_joints, 2), dtype=jnp.float32,
                                minval=0.5, maxval=2.0)
    SS = 0.1 * jax.random.normal(k3, (batch, n_joints, 2), dtype=jnp.float32)

    # deterministic parameter init mirroring Joints.__init__
    I_raw = jnp.full((n_joints,), _I_INIT, dtype=jnp.float32)
    B_raw = jnp.full((n_joints,), _B_INIT, dtype=jnp.float32)
    K_raw = jnp.full((n_joints,), _K_INIT, dtype=jnp.float32)
    M = jnp.stack([jnp.full((n_joints,), -_M_INIT, dtype=jnp.float32),
                   jnp.full((n_joints,), _M_INIT, dtype=jnp.float32)], axis=1)

    for speed_mode in (False, True):
        th_new, muscle_SSs, SSout = joints_forward(
            F, K_musc, SS, I_raw, B_raw, K_raw, M, dt=dt,
            speed_mode=speed_mode)
        jax.block_until_ready((th_new, muscle_SSs, SSout))

        assert th_new.shape == (batch, n_joints)
        assert SSout.shape == (batch, n_joints, 2)
        assert muscle_SSs.shape == (batch, n_joints, 2, 2)
        assert bool(jnp.all(jnp.isfinite(SSout)))

        th_r, mss_r, ss_r = _joints_ref(
            F, K_musc, SS, I_raw, B_raw, K_raw, M, dt=dt,
            speed_mode=speed_mode)
        assert bool(jnp.allclose(SSout, ss_r, rtol=5e-3, atol=5e-4))
        assert bool(jnp.allclose(th_new, th_r, rtol=5e-3, atol=5e-4))
        assert bool(jnp.allclose(muscle_SSs, mss_r, rtol=5e-3, atol=5e-4))

    # exercise the multi-tile + padded grid path (batch 600 -> 2 tiles of 384)
    big_batch = 600
    kb1, kb2, kb3 = jax.random.split(jax.random.PRNGKey(1), 3)
    Fb = jax.random.normal(kb1, (big_batch, n_joints, 2), dtype=jnp.float32)
    Kb = jax.random.uniform(kb2, (big_batch, n_joints, 2), dtype=jnp.float32,
                            minval=0.5, maxval=2.0)
    Sb = 0.1 * jax.random.normal(kb3, (big_batch, n_joints, 2),
                                 dtype=jnp.float32)
    _, _, ss_big = joints_forward(Fb, Kb, Sb, I_raw, B_raw, K_raw, M, dt=dt)
    jax.block_until_ready(ss_big)
    assert ss_big.shape == (big_batch, n_joints, 2)
    assert bool(jnp.all(jnp.isfinite(ss_big)))
    _, _, ss_big_ref = _joints_ref(Fb, Kb, Sb, I_raw, B_raw, K_raw, M, dt=dt)
    assert bool(jnp.allclose(ss_big, ss_big_ref, rtol=5e-3, atol=5e-4))

    print("KERNEL_OK")
</pallas_src>

<mosaic_0001>
module attributes {stable_mosaic.version = 11 : i64} {
  func.func @_joints_kernel(%arg0: i32, %arg1: memref<6x8x2xf32, #tpu.memory_space<vmem>>, %arg2: memref<6x8x1xf32, #tpu.memory_space<vmem>>, %arg3: memref<2x8x2xf32, #tpu.memory_space<vmem>>) attributes {dimension_semantics = [#tpu.dimension_semantics<parallel>], iteration_bounds = array<i64: 1>, scalar_prefetch = 0 : i64, scratch_operands = 0 : i64, tpu.core_type = #tpu.core_type<tc>, window_params = [{transform_indices = @transform_0, window_bounds = array<i64: 6, 8, 2>}, {pipeline_mode = #tpu.pipeline_mode<synchronous>, transform_indices = @transform_1, window_bounds = array<i64: 6, 8, 1>}, {transform_indices = @transform_2, window_bounds = array<i64: 2, 8, 2>}]} {
    %c0 = arith.constant 0 : index
    %c0_0 = arith.constant 0 : index
    %c0_1 = arith.constant 0 : index
    %0 = vector.load %arg1[%c0, %c0_0, %c0_1] : memref<6x8x2xf32, #tpu.memory_space<vmem>>, vector<1x8x2xf32>
    %1 = vector.shape_cast %0 : vector<1x8x2xf32> to vector<8x2xf32>
    %c1 = arith.constant 1 : index
    %c0_2 = arith.constant 0 : index
    %c0_3 = arith.constant 0 : index
    %2 = vector.load %arg1[%c1, %c0_2, %c0_3] : memref<6x8x2xf32, #tpu.memory_space<vmem>>, vector<1x8x2xf32>
    %3 = vector.shape_cast %2 : vector<1x8x2xf32> to vector<8x2xf32>
    %c2 = arith.constant 2 : index
    %c0_4 = arith.constant 0 : index
    %c0_5 = arith.constant 0 : index
    %4 = vector.load %arg1[%c2, %c0_4, %c0_5] : memref<6x8x2xf32, #tpu.memory_space<vmem>>, vector<1x8x2xf32>
    %5 = vector.shape_cast %4 : vector<1x8x2xf32> to vector<8x2xf32>
    %c3 = arith.constant 3 : index
    %c0_6 = arith.constant 0 : index
    %c0_7 = arith.constant 0 : index
    %6 = vector.load %arg1[%c3, %c0_6, %c0_7] : memref<6x8x2xf32, #tpu.memory_space<vmem>>, vector<1x8x2xf32>
    %7 = vector.shape_cast %6 : vector<1x8x2xf32> to vector<8x2xf32>
    %c4 = arith.constant 4 : index
    %c0_8 = arith.constant 0 : index
    %c0_9 = arith.constant 0 : index
    %8 = vector.load %arg1[%c4, %c0_8, %c0_9] : memref<6x8x2xf32, #tpu.memory_space<vmem>>, vector<1x8x2xf32>
    %9 = vector.shape_cast %8 : vector<1x8x2xf32> to vector<8x2xf32>
    %c5 = arith.constant 5 : index
    %c0_10 = arith.constant 0 : index
    %c0_11 = arith.constant 0 : index
    %10 = vector.load %arg1[%c5, %c0_10, %c0_11] : memref<6x8x2xf32, #tpu.memory_space<vmem>>, vector<1x8x2xf32>
    %11 = vector.shape_cast %10 : vector<1x8x2xf32> to vector<8x2xf32>
    %c0_12 = arith.constant 0 : index
    %c0_13 = arith.constant 0 : index
    %c0_14 = arith.constant 0 : index
    %12 = vector.load %arg2[%c0_12, %c0_13, %c0_14] : memref<6x8x1xf32, #tpu.memory_space<vmem>>, vector<1x8x1xf32>
    %13 = vector.shape_cast %12 : vector<1x8x1xf32> to vector<8x1xf32>
    %c1_15 = arith.constant 1 : index
    %c0_16 = arith.constant 0 : index
    %c0_17 = arith.constant 0 : index
    %14 = vector.load %arg2[%c1_15, %c0_16, %c0_17] : memref<6x8x1xf32, #tpu.memory_space<vmem>>, vector<1x8x1xf32>
    %15 = vector.shape_cast %14 : vector<1x8x1xf32> to vector<8x1xf32>
    %c2_18 = arith.constant 2 : index
    %c0_19 = arith.constant 0 : index
    %c0_20 = arith.constant 0 : index
    %16 = vector.load %arg2[%c2_18, %c0_19, %c0_20] : memref<6x8x1xf32, #tpu.memory_space<vmem>>, vector<1x8x1xf32>
    %17 = vector.shape_cast %16 : vector<1x8x1xf32> to vector<8x1xf32>
    %c3_21 = arith.constant 3 : index
    %c0_22 = arith.constant 0 : index
    %c0_23 = arith.constant 0 : index
    %18 = vector.load %arg2[%c3_21, %c0_22, %c0_23] : memref<6x8x1xf32, #tpu.memory_space<vmem>>, vector<1x8x1xf32>
    %19 = vector.shape_cast %18 : vector<1x8x1xf32> to vector<8x1xf32>
    %c4_24 = arith.constant 4 : index
    %c0_25 = arith.constant 0 : index
    %c0_26 = arith.constant 0 : index
    %20 = vector.load %arg2[%c4_24, %c0_25, %c0_26] : memref<6x8x1xf32, #tpu.memory_space<vmem>>, vector<1x8x1xf32>
    %21 = vector.shape_cast %20 : vector<1x8x1xf32> to vector<8x1xf32>
    %c5_27 = arith.constant 5 : index
    %c0_28 = arith.constant 0 : index
    %c0_29 = arith.constant 0 : index
    %22 = vector.load %arg2[%c5_27, %c0_28, %c0_29] : memref<6x8x1xf32, #tpu.memory_space<vmem>>, vector<1x8x1xf32>
    %23 = vector.shape_cast %22 : vector<1x8x1xf32> to vector<8x1xf32>
    %24 = vector.broadcast %13 : vector<8x1xf32> to vector<8x2xf32>
    %25 = arith.mulf %5, %24 : vector<8x2xf32>
    %26 = vector.broadcast %15 : vector<8x1xf32> to vector<8x2xf32>
    %27 = arith.mulf %7, %26 : vector<8x2xf32>
    %28 = arith.addf %25, %27 : vector<8x2xf32>
    %29 = vector.broadcast %17 : vector<8x1xf32> to vector<8x2xf32>
    %30 = arith.addf %28, %29 : vector<8x2xf32>
    %cst = arith.constant 0.000000e+00 : f32
    %31 = vector.broadcast %cst : f32 to vector<8x2xf32>
    %32 = arith.subf %31, %30 : vector<8x2xf32>
    %33 = math.sqrt %30 : vector<8x2xf32>
    %34 = vector.broadcast %19 : vector<8x1xf32> to vector<8x2xf32>
    %35 = arith.mulf %34, %33 : vector<8x2xf32>
    %36 = vector.broadcast %21 : vector<8x1xf32> to vector<8x2xf32>
    %37 = arith.mulf %1, %36 : vector<8x2xf32>
    %38 = vector.broadcast %23 : vector<8x1xf32> to vector<8x2xf32>
    %39 = arith.mulf %3, %38 : vector<8x2xf32>
    %40 = arith.addf %37, %39 : vector<8x2xf32>
    %cst_30 = arith.constant 0.000000e+00 : f32
    %41 = vector.broadcast %cst_30 : f32 to vector<8x2xf32>
    %42 = arith.subf %41, %40 : vector<8x2xf32>
    %cst_31 = arith.constant 0.00999999977 : f32
    %43 = vector.broadcast %cst_31 : f32 to vector<8x2xf32>
    %44 = arith.mulf %32, %43 : vector<8x2xf32>
    %cst_32 = arith.constant 0.00999999977 : f32
    %45 = vector.broadcast %cst_32 : f32 to vector<8x2xf32>
    %46 = arith.mulf %35, %45 : vector<8x2xf32>
    %cst_33 = arith.constant 5.000000e-01 : f32
    %47 = vector.broadcast %cst_33 : f32 to vector<8x2xf32>
    %48 = arith.mulf %47, %46 : vector<8x2xf32>
    %cst_34 = arith.constant 0.000000e+00 : f32
    %49 = vector.broadcast %cst_34 : f32 to vector<8x2xf32>
    %50 = arith.subf %49, %48 : vector<8x2xf32>
    %51 = arith.mulf %48, %48 : vector<8x2xf32>
    %cst_35 = arith.constant 0.00999999977 : f32
    %52 = vector.broadcast %cst_35 : f32 to vector<8x2xf32>
    %53 = arith.mulf %52, %44 : vector<8x2xf32>
    %54 = arith.addf %51, %53 : vector<8x2xf32>
    %55 = math.absf %54 : vector<8x2xf32>
    %56 = math.sqrt %55 : vector<8x2xf32>
    %cst_36 = arith.constant 9.99999996E-13 : f32
    %57 = vector.broadcast %cst_36 : f32 to vector<8x2xf32>
    %58 = arith.cmpf olt, %55, %57 : vector<8x2xf32>
    %cst_37 = arith.constant 1.000000e+00 : f32
    %59 = vector.broadcast %cst_37 : f32 to vector<8x2xf32>
    %60 = arith.select %58, %59, %55 : vector<8x2xi1>, vector<8x2xf32>
    %61 = math.rsqrt %60 : vector<8x2xf32>
    %cst_38 = arith.constant 0.000000e+00 : f32
    %62 = vector.broadcast %cst_38 : f32 to vector<8x2xf32>
    %63 = arith.cmpf oge, %54, %62 : vector<8x2xf32>
    %cst_39 = arith.constant 0.000000e+00 : f32
    %64 = vector.broadcast %cst_39 : f32 to vector<8x2xf32>
    %65 = arith.select %63, %56, %64 : vector<8x2xi1>, vector<8x2xf32>
    %66 = math.exp %65 : vector<8x2xf32>
    %67 = tpu.reciprocal %66 {approx = true} : vector<8x2xf32> -> vector<8x2xf32>
    %68 = arith.addf %66, %67 : vector<8x2xf32>
    %cst_40 = arith.constant 5.000000e-01 : f32
    %69 = vector.broadcast %cst_40 : f32 to vector<8x2xf32>
    %70 = arith.mulf %69, %68 : vector<8x2xf32>
    %71 = math.cos %56 : vector<8x2xf32>
    %72 = arith.select %63, %70, %71 : vector<8x2xi1>, vector<8x2xf32>
    %73 = arith.subf %66, %67 : vector<8x2xf32>
    %cst_41 = arith.constant 5.000000e-01 : f32
    %74 = vector.broadcast %cst_41 : f32 to vector<8x2xf32>
    %75 = arith.mulf %74, %73 : vector<8x2xf32>
    %76 = math.sin %56 : vector<8x2xf32>
    %77 = arith.select %63, %75, %76 : vector<8x2xi1>, vector<8x2xf32>
    %cst_42 = arith.constant 0.166666672 : f32
    %78 = vector.broadcast %cst_42 : f32 to vector<8x2xf32>
    %79 = arith.mulf %54, %78 : vector<8x2xf32>
    %cst_43 = arith.constant 1.000000e+00 : f32
    %80 = vector.broadcast %cst_43 : f32 to vector<8x2xf32>
    %81 = arith.addf %80, %79 : vector<8x2xf32>
    %82 = arith.mulf %77, %61 : vector<8x2xf32>
    %83 = arith.select %58, %81, %82 : vector<8x2xi1>, vector<8x2xf32>
    %84 = math.exp %48 : vector<8x2xf32>
    %85 = arith.mulf %50, %83 : vector<8x2xf32>
    %86 = arith.addf %72, %85 : vector<8x2xf32>
    %87 = arith.mulf %84, %86 : vector<8x2xf32>
    %cst_44 = arith.constant 0.00999999977 : f32
    %88 = vector.broadcast %cst_44 : f32 to vector<8x2xf32>
    %89 = arith.mulf %88, %83 : vector<8x2xf32>
    %90 = arith.mulf %84, %89 : vector<8x2xf32>
    %91 = arith.mulf %44, %83 : vector<8x2xf32>
    %92 = arith.mulf %84, %91 : vector<8x2xf32>
    %93 = arith.mulf %50, %83 : vector<8x2xf32>
    %94 = arith.subf %72, %93 : vector<8x2xf32>
    %95 = arith.mulf %84, %94 : vector<8x2xf32>
    %96 = tpu.reciprocal %30 {approx = true} : vector<8x2xf32> -> vector<8x2xf32>
    %97 = arith.mulf %35, %90 : vector<8x2xf32>
    %cst_45 = arith.constant 1.000000e+00 : f32
    %98 = vector.broadcast %cst_45 : f32 to vector<8x2xf32>
    %99 = arith.subf %95, %98 : vector<8x2xf32>
    %100 = arith.subf %97, %99 : vector<8x2xf32>
    %101 = arith.mulf %100, %96 : vector<8x2xf32>
    %102 = arith.mulf %101, %42 : vector<8x2xf32>
    %103 = arith.mulf %87, %9 : vector<8x2xf32>
    %104 = arith.mulf %90, %11 : vector<8x2xf32>
    %105 = arith.addf %103, %104 : vector<8x2xf32>
    %106 = arith.addf %105, %102 : vector<8x2xf32>
    %107 = arith.mulf %92, %9 : vector<8x2xf32>
    %108 = arith.mulf %95, %11 : vector<8x2xf32>
    %109 = arith.addf %107, %108 : vector<8x2xf32>
    %110 = arith.mulf %90, %42 : vector<8x2xf32>
    %111 = arith.addf %109, %110 : vector<8x2xf32>
    %c0_46 = arith.constant 0 : index
    %c0_47 = arith.constant 0 : index
    %c0_48 = arith.constant 0 : index
    %112 = vector.load %arg3[%c0_46, %c0_47, %c0_48] : memref<2x8x2xf32, #tpu.memory_space<vmem>>, vector<1x8x2xf32>
    %113 = vector.shape_cast %112 : vector<1x8x2xf32> to vector<8x2xf32>
    %114 = vector.shape_cast %106 : vector<8x2xf32> to vector<1x8x2xf32>
    tpu.vector_store %arg3[%c0_46, %c0_47, %c0_48], %114 {strides = array<i32>} : memref<2x8x2xf32, #tpu.memory_space<vmem>>, vector<1x8x2xf32>,
    %c1_49 = arith.constant 1 : index
    %c0_50 = arith.constant 0 : index
    %c0_51 = arith.constant 0 : index
    %115 = vector.load %arg3[%c1_49, %c0_50, %c0_51] : memref<2x8x2xf32, #tpu.memory_space<vmem>>, vector<1x8x2xf32>
    %116 = vector.shape_cast %115 : vector<1x8x2xf32> to vector<8x2xf32>
    %117 = vector.shape_cast %111 : vector<8x2xf32> to vector<1x8x2xf32>
    tpu.vector_store %arg3[%c1_49, %c0_50, %c0_51], %117 {strides = array<i32>} : memref<2x8x2xf32, #tpu.memory_space<vmem>>, vector<1x8x2xf32>,
    return
  }
  func.func @transform_0(%arg0: i32) -> (i32, i32, i32) {
    %c0_i32 = arith.constant 0 : i32
    %c0_i32_0 = arith.constant 0 : i32
    %c0_i32_1 = arith.constant 0 : i32
    return %c0_i32, %c0_i32_0, %arg0 : i32, i32, i32
  }
  func.func @transform_1(%arg0: i32) -> (i32, i32, i32) {
    %c0_i32 = arith.constant 0 : i32
    %c0_i32_0 = arith.constant 0 : i32
    %c0_i32_1 = arith.constant 0 : i32
    %c0_i32_2 = arith.constant 0 : i32
    return %c0_i32, %c0_i32_0, %c0_i32_1 : i32, i32, i32
  }
  func.func @transform_2(%arg0: i32) -> (i32, i32, i32) {
    %c0_i32 = arith.constant 0 : i32
    %c0_i32_0 = arith.constant 0 : i32
    %c0_i32_1 = arith.constant 0 : i32
    return %c0_i32, %c0_i32_0, %arg0 : i32, i32, i32
  }
}

</mosaic_0001>

<llo_original>
// kernel: joints_forward.1
$region0: #{joints_forward.1}
  #allocation0 [shape = 'u32[]', space=smem, size = 0x4, offset = 0x4, fixed_abs, tag = 'smem constant byte address 0x4 - core index']
  #allocation1 [shape = 'u32[144,128]{1,0:T(1,128)}', space=vmem, size = 0x12000, scoped, tag = 'internal scratch']
  %s0 = inlined_call_operand.vmem [shape: f32[6,8,2], index: 0, kind: input, shape index: {}]
  %s1 = inlined_call_operand.vmem [shape: f32[6,8,1], index: 1, kind: input, shape index: {}]
  %s2 = inlined_call_operand.vmem [shape: f32[2,8,2], index: 2, kind: output, shape index: {}]
  %s3 = sld [smem:[#allocation0]]
  $region18: #{joints_forward.1} parent=0
    _
  %s5 = ssub.s32 1, %s3
  %s6 = scalar_select 0, %s5, %s3
  // Predicated region
  $region2: #{joints_forward.1} parent=0 // pred_check
    _
  $region3: #{joints_forward.1} parent=0 // pred_check_branch
    %8 = sbr.rel (0) target = $region5
  $region4: #{joints_forward.1} parent=0 // pred_region
    _
  $region5: #{joints_forward.1} parent=0 // pred_fallthru
    _
  // Predicated region
  $region6: #{joints_forward.1} parent=0 // pred_check
    _
  $region7: #{joints_forward.1} parent=0 // pred_check_branch
    %10 = sbr.rel (0) target = $region9
  $region8: #{joints_forward.1} parent=0 // pred_region
    _
  $region9: #{joints_forward.1} parent=0 // pred_fallthru
    _
  %v11 = vld [vmem:[%s0] sm:$0xff]
  %s12 = scalar_lea.vmem %s0, 8
  %v13 = vld [vmem:[%s12] sm:$0xff]
  %s14 = scalar_lea.vmem %s0, 16
  %v15 = vld [vmem:[%s14] sm:$0xff]
  %s16 = scalar_lea.vmem %s0, 24
  %v17 = vld [vmem:[%s16] sm:$0xff]
  %s18 = scalar_lea.vmem %s0, 32
  %v19 = vld [vmem:[%s18] sm:$0xff]
  %s20 = scalar_lea.vmem %s0, 40
  %v21 = vld [vmem:[%s20] sm:$0xff]
  %v22 = vld [vmem:[%s1] sm:$0xff]
  %s23 = scalar_lea.vmem %s1, 8
  %v24 = vld [vmem:[%s23] sm:$0xff]
  %s25 = scalar_lea.vmem %s1, 16
  %v26 = vld [vmem:[%s25] sm:$0xff]
  %s27 = scalar_lea.vmem %s1, 24
  %v28 = vld [vmem:[%s27] sm:$0xff]
  %s29 = scalar_lea.vmem %s1, 32
  %v30 = vld [vmem:[%s29] sm:$0xff]
  %s31 = scalar_lea.vmem %s1, 40
  %v32 = vld [vmem:[%s31] sm:$0xff]
  %34 = vset.pattern.permute.xlu0 0
  %35 = vperm.xlu0 %34, %v22
  %v36 = vpop.permute.xlu0 %35
  %v38 = vmul.f32 %v15, %v36
  %40 = vset.pattern.permute.xlu0 0
  %41 = vperm.xlu0 %40, %v24
  %v42 = vpop.permute.xlu0 %41
  %v44 = vmul.f32 %v17, %v42
  %v45 = vadd.f32 %v38, %v44
  %47 = vset.pattern.permute.xlu0 0
  %48 = vperm.xlu0 %47, %v26
  %v49 = vpop.permute.xlu0 %48
  %v51 = vadd.f32 %v45, %v49
  %v52 = vsub.f32 0.0, %v51
  %v53 = vrsqrt.pop %v51
  %v54 = vmul.f32 %v51, %v53
  %vm55 = vcmp.eq.f32.partialorder %v51, inf
  %v56 = vsel %vm55, %v51, %v54
  %vm57 = vcmp.eq.f32.partialorder %v51, 0.0
  %v58 = vand.u32 %v51, 2147483648
  %v59 = vsel %vm57, %v58, %v56
  %61 = vset.pattern.permute.xlu0 0
  %62 = vperm.xlu0 %61, %v28
  %v63 = vpop.permute.xlu0 %62
  %v65 = vmul.f32 %v63, %v59
  %67 = vset.pattern.permute.xlu0 0
  %68 = vperm.xlu0 %67, %v30
  %v69 = vpop.permute.xlu0 %68
  %v71 = vmul.f32 %v11, %v69
  %73 = vset.pattern.permute.xlu0 0
  %74 = vperm.xlu0 %73, %v32
  %v75 = vpop.permute.xlu0 %74
  %v77 = vmul.f32 %v13, %v75
  %v78 = vadd.f32 %v71, %v77
  %v79 = vsub.f32 0.0, %v78
  %v80 = vmul.f32 %v52, 0.01
  %v81 = vmul.f32 %v65, 0.01
  %v82 = vmul.f32 %v81, 0.5
  %v83 = vsub.f32 0.0, %v82
  %v84 = vmul.f32 %v82, %v82
  %v85 = vmul.f32 %v80, 0.01
  %v86 = vadd.f32 %v84, %v85
  %v87 = vand.u32 2147483647, %v86
  %v88 = vrsqrt.pop %v87
  %v89 = vmul.f32 %v87, %v88
  %vm90 = vcmp.eq.f32.partialorder %v87, inf
  %v91 = vsel %vm90, %v87, %v89
  %vm92 = vcmp.eq.f32.partialorder %v87, 0.0
  %v93 = vand.u32 %v87, 2147483648
  %v94 = vsel %vm92, %v93, %v91
  %vm95 = vcmp.lt.f32.partialorder %v87, 1e-12
  %v96 = vsel %vm95, 1.0, %v87
  %v97 = vrsqrt.pop %v96
  %vm98 = vcmp.ge.f32.partialorder %v86, 0.0
  %v99 = vsel %vm98, %v94, 0.0
  %v100 = vmul.f32 %v99, 1.442695
  %v101 = vpow.pop %v100
  %v102 = vrcp.pop %v101
  %v103 = vadd.f32 %v101, %v102
  %v104 = vmul.f32 %v103, 0.5
  %v105 = vand.u32 2147483647, %v94
  %vm106 = vcmp.le.f32.partialorder %v105, 0.7853982
  %vm107 = vcmp.lt.s32.totalorder %v94, 0
  %v108 = vand.u32 %v94, 2139095040
  %v109 = vshrl.u32 %v108, 23
  %v110 = vsub.s32 %v109, 127
  %v111 = vand.u32 2147483647, %v94
  %v112 = vand.u32 %v111, 8388607
  %v113 = vor.u32 %v112, 8388608
  %v114 = vsub.s32 0, %v113
  %v115 = vadd.s32 %v110, 1
  %vm116 = vcmp.gt.s32.totalorder %v115, 0
  %v117 = vsel %vm116, %v115, 0
  %v118 = vshrl.u32 %v117, 5
  %v119 = vand.u32 %v117, 31
  %v120 = vsub.s32 32, %v119
  %v121 = vshrl.u32 683565275, %v120
  %v122 = vshll.u32 683565275, %v119
  %v123 = vshrl.u32 2475754826, %v120
  %v124 = vor.u32 %v122, %v123
  %v125 = vshll.u32 2475754826, %v119
  %v126 = vshrl.u32 2131351028, %v120
  %v127 = vor.u32 %v125, %v126
  %v128 = vshll.u32 2131351028, %v119
  %v129 = vshrl.u32 2102212464, %v120
  %v130 = vor.u32 %v128, %v129
  %v131 = vshll.u32 2102212464, %v119
  %v132 = vshrl.u32 920167782, %v120
  %v133 = vor.u32 %v131, %v132
  %v134 = vshll.u32 920167782, %v119
  %v135 = vshrl.u32 1326507024, %v120
  %v136 = vor.u32 %v134, %v135
  %vm137 = vcmp.lt.s32.totalorder %v118, 1
  %vm138 = vcmp.lt.s32.totalorder %v118, 2
  %vm139 = vcmp.lt.s32.totalorder %v118, 3
  %vm140 = vcmp.lt.s32.totalorder %v118, 4
  %v141 = vsel %vm137, %v121, %v124
  %v142 = vsel %vm140, %v130, 2102212464
  %v143 = vsel %vm139, %v127, %v142
  %v144 = vsel %vm138, %v141, %v143
  %v145 = vsel %vm137, %v124, %v127
  %v146 = vsel %vm140, %v133, 920167782
  %v147 = vsel %vm139, %v130, %v146
  %v148 = vsel %vm138, %v145, %v147
  %v149 = vsel %vm137, %v127, %v130
  %v150 = vsel %vm140, %v136, 1326507024
  %v151 = vsel %vm139, %v133, %v150
  %v152 = vsel %vm138, %v149, %v151
  %v153 = vshll.u32 %v113, 8
  %v154 = vmul.u32.u64.compose %v153, %v152
  %v155 = vextract.low.u32 %v154
  %v156 = vextract.high.u32 %v154
  %v157 = vmul.u32.u64.compose %v153, %v148
  %v158 = vextract.low.u32 %v157
  %v159 = vextract.high.u32 %v157
  %v160 = vmul.u32 %v153, %v144
  %v161 = vadd.s32 %v156, %v158
  %vm162 = vc.u32 %v156, %v158
  %v163 = vadd.s32 %v159, 1
  %v164 = vsel %vm162, %v163, %v159
  %v165 = vadd.s32 %v160, %v164
  %v166 = vadd.s32 %v165, 536870912
  %v167 = vshrl.u32 %v166, 30
  %v168 = vshll.u32 %v167, 30
  %v169 = vsub.s32 %v165, %v168
  %vm170 = vcmp.lt.s32.totalorder %v169, 0
  %v171 = vsub.s32 0, %v169
  %v172 = vsel %vm170, %v171, %v169
  %v173 = vclz %v172
  %v174 = vsub.s32 %v173, 2
  %vm175 = vcmp.gt.s32.totalorder 0, %v174
  %v176 = vsel %vm175, 0, %v174
  %v177 = vsub.s32 32, %v176
  %v178 = vshll.u32 %v169, %v176
  %v179 = vshrl.u32 %v161, %v177
  %v180 = vor.u32 %v178, %v179
  %v181 = vsub.s32 4294967266, %v176
  %v182 = vadd.s32 %v181, 127
  %v183 = vshll.u32 %v182, 23
  %v184 = vor.u32 4788187, %v183
  %v185 = vand.u32 2147483647, %v184
  %v187 = vcvt.s32.f32 %v180
  %v188 = vmul.f32 %v187, %v185
  %v189 = vxor.u32 %v188, 2147483648
  %v190 = vsel %vm107, %v189, %v188
  %v191 = vsub.s32 4, %v167
  %v192 = vsel %vm107, %v191, %v167
  %v193 = vsel %vm106, %v94, %v190
  %v194 = vsel %vm106, 0, %v192
  %v195 = vcosq.f32.pop %v193
  %v196 = vsinq.f32.pop %v193
  %vm197 = vweird.f32 %v94
  %v198 = vand.u32 %v194, 3
  %vm199 = vcmp.lt.s32.totalorder %v198, 2
  %vm200 = vcmp.eq.s32.totalorder %v198, 0
  %v201 = vxor.u32 %v196, 2147483648
  %v202 = vsel %vm200, %v195, %v201
  %vm203 = vcmp.eq.s32.totalorder %v198, 2
  %v204 = vxor.u32 %v195, 2147483648
  %v205 = vsel %vm203, %v204, %v196
  %v206 = vsel %vm199, %v202, %v205
  %v207 = vsel %vm197, nan, %v206
  %v208 = vsel %vm98, %v104, %v207
  %v209 = vsub.f32 %v101, %v102
  %v210 = vmul.f32 %v209, 0.5
  %v211 = vand.u32 2147483647, %v94
  %vm212 = vcmp.le.f32.partialorder %v211, 0.7853982
  %vm213 = vcmp.lt.s32.totalorder %v94, 0
  %v214 = vand.u32 %v94, 2139095040
  %v215 = vshrl.u32 %v214, 23
  %v216 = vsub.s32 %v215, 127
  %v217 = vand.u32 2147483647, %v94
  %v218 = vand.u32 %v217, 8388607
  %v219 = vor.u32 %v218, 8388608
  %v220 = vsub.s32 0, %v219
  %v221 = vadd.s32 %v216, 1
  %vm222 = vcmp.gt.s32.totalorder %v221, 0
  %v223 = vsel %vm222, %v221, 0
  %v224 = vshrl.u32 %v223, 5
  %v225 = vand.u32 %v223, 31
  %v226 = vsub.s32 32, %v225
  %v227 = vshrl.u32 683565275, %v226
  %v228 = vshll.u32 683565275, %v225
  %v229 = vshrl.u32 2475754826, %v226
  %v230 = vor.u32 %v228, %v229
  %v231 = vshll.u32 2475754826, %v225
  %v232 = vshrl.u32 2131351028, %v226
  %v233 = vor.u32 %v231, %v232
  %v234 = vshll.u32 2131351028, %v225
  %v235 = vshrl.u32 2102212464, %v226
  %v236 = vor.u32 %v234, %v235
  %v237 = vshll.u32 2102212464, %v225
  %v238 = vshrl.u32 920167782, %v226
  %v239 = vor.u32 %v237, %v238
  %v240 = vshll.u32 920167782, %v225
  %v241 = vshrl.u32 1326507024, %v226
  %v242 = vor.u32 %v240, %v241
  %vm243 = vcmp.lt.s32.totalorder %v224, 1
  %vm244 = vcmp.lt.s32.totalorder %v224, 2
  %vm245 = vcmp.lt.s32.totalorder %v224, 3
  %vm246 = vcmp.lt.s32.totalorder %v224, 4
  %v247 = vsel %vm243, %v227, %v230
  %v248 = vsel %vm246, %v236, 2102212464
  %v249 = vsel %vm245, %v233, %v248
  %v250 = vsel %vm244, %v247, %v249
  %v251 = vsel %vm243, %v230, %v233
  %v252 = vsel %vm246, %v239, 920167782
  %v253 = vsel %vm245, %v236, %v252
  %v254 = vsel %vm244, %v251, %v253
  %v255 = vsel %vm243, %v233, %v236
  %v256 = vsel %vm246, %v242, 1326507024
  %v257 = vsel %vm245, %v239, %v256
  %v258 = vsel %vm244, %v255, %v257
  %v259 = vshll.u32 %v219, 8
  %v260 = vmul.u32.u64.compose %v259, %v258
  %v261 = vextract.low.u32 %v260
  %v262 = vextract.high.u32 %v260
  %v263 = vmul.u32.u64.compose %v259, %v254
  %v264 = vextract.low.u32 %v263
  %v265 = vextract.high.u32 %v263
  %v266 = vmul.u32 %v259, %v250
  %v267 = vadd.s32 %v262, %v264
  %vm268 = vc.u32 %v262, %v264
  %v269 = vadd.s32 %v265, 1
  %v270 = vsel %vm268, %v269, %v265
  %v271 = vadd.s32 %v266, %v270
  %v272 = vadd.s32 %v271, 536870912
  %v273 = vshrl.u32 %v272, 30
  %v274 = vshll.u32 %v273, 30
  %v275 = vsub.s32 %v271, %v274
  %vm276 = vcmp.lt.s32.totalorder %v275, 0
  %v277 = vsub.s32 0, %v275
  %v278 = vsel %vm276, %v277, %v275
  %v279 = vclz %v278
  %v280 = vsub.s32 %v279, 2
  %vm281 = vcmp.gt.s32.totalorder 0, %v280
  %v282 = vsel %vm281, 0, %v280
  %v283 = vsub.s32 32, %v282
  %v284 = vshll.u32 %v275, %v282
  %v285 = vshrl.u32 %v267, %v283
  %v286 = vor.u32 %v284, %v285
  %v287 = vsub.s32 4294967266, %v282
  %v288 = vadd.s32 %v287, 127
  %v289 = vshll.u32 %v288, 23
  %v290 = vor.u32 4788187, %v289
  %v291 = vand.u32 2147483647, %v290
  %v293 = vcvt.s32.f32 %v286
  %v294 = vmul.f32 %v293, %v291
  %v295 = vxor.u32 %v294, 2147483648
  %v296 = vsel %vm213, %v295, %v294
  %v297 = vsub.s32 4, %v273
  %v298 = vsel %vm213, %v297, %v273
  %v299 = vsel %vm212, %v94, %v296
  %v300 = vsel %vm212, 0, %v298
  %v301 = vcosq.f32.pop %v299
  %v302 = vsinq.f32.pop %v299
  %vm303 = vweird.f32 %v94
  %v304 = vadd.s32 %v300, 3
  %v305 = vand.u32 %v304, 3
  %vm306 = vcmp.lt.s32.totalorder %v305, 2
  %vm307 = vcmp.eq.s32.totalorder %v305, 0
  %v308 = vxor.u32 %v302, 2147483648
  %v309 = vsel %vm307, %v301, %v308
  %vm310 = vcmp.eq.s32.totalorder %v305, 2
  %v311 = vxor.u32 %v301, 2147483648
  %v312 = vsel %vm310, %v311, %v302
  %v313 = vsel %vm306, %v309, %v312
  %v314 = vsel %vm303, nan, %v313
  %v315 = vsel %vm98, %v210, %v314
  %v316 = vmul.f32 %v86, 0.16666667
  %v317 = vadd.f32 %v316, 1.0
  %v318 = vmul.f32 %v315, %v97
  %v319 = vsel %vm95, %v317, %v318
  %v320 = vmul.f32 %v82, 1.442695
  %v321 = vpow.pop %v320
  %v322 = vmul.f32 %v83, %v319
  %v323 = vadd.f32 %v208, %v322
  %v324 = vmul.f32 %v321, %v323
  %v325 = vmul.f32 %v319, 0.01
  %v326 = vmul.f32 %v321, %v325
  %v327 = vmul.f32 %v80, %v319
  %v328 = vmul.f32 %v321, %v327
  %v329 = vsub.f32 %v208, %v322
  %v330 = vmul.f32 %v321, %v329
  %v331 = vrcp.pop %v51
  %v332 = vmul.f32 %v65, %v326
  %v333 = vsub.f32 %v330, 1.0
  %v334 = vsub.f32 %v332, %v333
  %v335 = vmul.f32 %v334, %v331
  %v336 = vmul.f32 %v335, %v79
  %v337 = vmul.f32 %v324, %v19
  %v338 = vmul.f32 %v326, %v21
  %v339 = vadd.f32 %v337, %v338
  %v340 = vadd.f32 %v339, %v336
  %v341 = vmul.f32 %v328, %v19
  %v342 = vmul.f32 %v330, %v21
  %v343 = vadd.f32 %v341, %v342
  %v344 = vmul.f32 %v326, %v79
  %v345 = vadd.f32 %v343, %v344
  %vm346 = vcmask 15360
  %347 = vst.msk [vmem:[%s2] sm:$0xff] %vm346, %v340
  %s348 = scalar_lea.vmem %s2, 8
  %349 = vst.msk [vmem:[%s348] sm:$0xff] %vm346, %v345
  // Predicated region
  $region10: #{joints_forward.1} parent=0 // pred_check
    _
  $region11: #{joints_forward.1} parent=0 // pred_check_branch
    %351 = sbr.rel (0) target = $region13
  $region12: #{joints_forward.1} parent=0 // pred_region
    _
  $region13: #{joints_forward.1} parent=0 // pred_fallthru
    _
  // Predicated region
  $region14: #{joints_forward.1} parent=0 // pred_check
    _
  $region15: #{joints_forward.1} parent=0 // pred_check_branch
    %353 = sbr.rel (0) target = $region17
  $region16: #{joints_forward.1} parent=0 // pred_region
    _
  $region17: #{joints_forward.1} parent=0 // pred_fallthru
    _

</llo_original>
